<compile_context>
chip_gen: v7x
topology: tpu7x:2x2x1
jax: 0.10.0
libtpu: 0.0.40
codegen_flags: <defaults>
</compile_context>

<pallas_src>
import numpy as np
import jax
import jax.numpy as jnp
from jax.experimental import pallas as pl
from jax.experimental.pallas import tpu as pltpu


def _round_up(x, m):
    return ((x + m - 1) // m) * m


def _lrelu(x, slope=0.01):
    return jnp.where(x > 0, x, slope * x)


# --------------------------------------------------------------------------
# Stage 1: per-graph mean / max pooling over a dense (B_pad, T_pad, 64) layout
# --------------------------------------------------------------------------
def pool_kernel(cnt_ref, h_ref, out_ref):
    b = pl.program_id(0)
    cnt = cnt_ref[b]                                  # SMEM scalar: atoms in graph b
    h = h_ref[0]                                      # (T_pad, EMB); padding rows are zero

    rows = jax.lax.broadcasted_iota(jnp.int32, (h.shape[0], 1), 0)
    valid = rows < cnt                                # only the trailing rows are padding

    s = jnp.sum(h, axis=0, keepdims=True)             # zeros in padding rows -> exact sum
    cntf = jnp.maximum(cnt.astype(jnp.float32), 1.0)  # empty-graph guard
    mean = s * (1.0 / cntf)                           # (1, EMB)

    mx = jnp.max(jnp.where(valid, h, -3.0e38), axis=0, keepdims=True)
    mx = jnp.where(cnt > 0, mx, 0.0)                  # zero-fill empty graphs

    out_ref[0] = jnp.concatenate([mean, mx], axis=-1)  # lane-dense (1, 128)


# --------------------------------------------------------------------------
# Stage 2: batched lattice MLP + fc_out head over all graphs at once
# --------------------------------------------------------------------------
def head_kernel(lat_ref, pooled_ref,
                w1_ref, b1_ref, w2_ref, b2_ref, w3_ref, b3_ref,
                w4p_ref, w4l_ref, b4_ref, w5_ref, b5_ref,
                w6_ref, b6_ref, w7_ref, b7_ref, out_ref):
    f32 = jnp.float32

    # pred_lattice_en: 6 -> 256 -> ReLU -> 256 -> ReLU -> 12 (out padded to 128)
    lat = lat_ref[...]                                                   # (B_pad, 8)
    z = jnp.maximum(jnp.dot(lat, w1_ref[...], preferred_element_type=f32) + b1_ref[...], 0.0)
    z = jnp.maximum(jnp.dot(z, w2_ref[...], preferred_element_type=f32) + b2_ref[...], 0.0)
    latent = jnp.dot(z, w3_ref[...], preferred_element_type=f32) + b3_ref[...]   # (B_pad, 128)

    # fc_out: concat([mean, max, latent]) @ W4 split into pooled/latent parts.
    pooled = pooled_ref[...]                                             # (B_pad, 128)
    y = (jnp.dot(pooled, w4p_ref[...], preferred_element_type=f32)
         + jnp.dot(latent, w4l_ref[...], preferred_element_type=f32)
         + b4_ref[...])
    y = _lrelu(y)
    y = _lrelu(jnp.dot(y, w5_ref[...], preferred_element_type=f32) + b5_ref[...])
    y = _lrelu(jnp.dot(y, w6_ref[...], preferred_element_type=f32) + b6_ref[...])
    out_ref[...] = jnp.dot(y, w7_ref[...], preferred_element_type=f32) + b7_ref[...]


def _pad2(a, rows, cols):
    r, c = a.shape
    return jnp.pad(a, ((0, rows - r), (0, cols - c)))


def finetune_ende_forward(hidden_atom, batch_idx, lattice, params):
    """hidden_atom: (N, 64) f32; batch_idx: (N,) int32 (sorted); lattice: (B, 6) f32."""
    f32 = jnp.float32
    N, EMB = hidden_atom.shape
    B = lattice.shape[0]

    # ---- host-side segment layout (static numpy) ----
    bi = np.asarray(batch_idx)
    assert np.all(np.diff(bi) >= 0), "batch_idx must be sorted (contiguous graphs)"
    counts = np.bincount(bi, minlength=B).astype(np.int64)
    starts = np.concatenate([[0], np.cumsum(counts)[:-1]])

    B_pad = _round_up(max(B, 1), 8)
    T_pad = _round_up(max(int(counts.max()), 1), 8)

    # Dense per-graph layout: graph b owns rows [b, 0:counts[b], :], padding rows zero.
    within = np.arange(N) - starts[bi]
    h_dense = jnp.zeros((B_pad, T_pad, EMB), f32).at[
        jnp.asarray(bi, jnp.int32), jnp.asarray(within, jnp.int32)
    ].set(hidden_atom.astype(f32))

    counts_pad = np.zeros((B_pad,), np.int32)
    counts_pad[:B] = counts
    counts_j = jnp.asarray(counts_pad)                                  # scalar prefetch

    lat_pad = jnp.zeros((B_pad, 8), f32).at[:B, :6].set(lattice.astype(f32))

    # ---------------- stage 1: pooling ----------------
    pooled = pl.pallas_call(
        pool_kernel,
        out_shape=jax.ShapeDtypeStruct((B_pad, 1, 2 * EMB), f32),
        grid_spec=pltpu.PrefetchScalarGridSpec(
            num_scalar_prefetch=1,
            grid=(B_pad,),
            in_specs=[pl.BlockSpec((1, T_pad, EMB), lambda b, cnt: (b, 0, 0))],
            out_specs=pl.BlockSpec((1, 1, 2 * EMB), lambda b, cnt: (b, 0, 0)),
        ),
        compiler_params=pltpu.CompilerParams(dimension_semantics=("parallel",)),
        cost_estimate=pl.CostEstimate(
            flops=int(4 * B_pad * T_pad * EMB),
            transcendentals=0,
            bytes_accessed=int(4 * (h_dense.size + B_pad * 2 * EMB))),
    )(counts_j, h_dense)
    pooled = pooled.reshape(B_pad, 2 * EMB)                              # (B_pad, 128)

    # ---------------- stage 2: batched lattice MLP + head ----------------
    w4 = params["w4"]                                                    # (140, 70)
    weights = (
        _pad2(params["w1"], 8, 256), params["b1"],                       # 6->256 (K padded to 8)
        params["w2"], params["b2"],                                      # 256->256
        _pad2(params["w3"], 256, 128), _pad2(params["b3"], 1, 128),      # 256->12 (out padded)
        _pad2(w4[:2 * EMB], 128, 128),                                   # [mean|max] part of fc_out[0]
        _pad2(w4[2 * EMB:], 128, 128),                                   # latent part
        _pad2(params["b4"], 1, 128),
        _pad2(params["w5"], 128, 128), _pad2(params["b5"], 1, 128),
        _pad2(params["w6"], 128, 128), _pad2(params["b6"], 1, 128),
        _pad2(params["w7"], 128, 128), _pad2(params["b7"], 1, 128),
    )

    head_in_specs = (
        [pl.BlockSpec((B_pad, 8), lambda i: (0, 0)),
         pl.BlockSpec((B_pad, 2 * EMB), lambda i: (0, 0))]
        + [pl.BlockSpec(w.shape, lambda i: (0, 0)) for w in weights]
    )
    flops_head = 2 * B_pad * (8 * 256 + 256 * 256 + 256 * 128 + 5 * 128 * 128)
    weight_bytes = sum(int(w.size) * 4 for w in weights)

    out = pl.pallas_call(
        head_kernel,
        out_shape=jax.ShapeDtypeStruct((B_pad, 128), f32),
        grid_spec=pltpu.PrefetchScalarGridSpec(
            num_scalar_prefetch=0,
            grid=(1,),
            in_specs=head_in_specs,
            out_specs=pl.BlockSpec((B_pad, 128), lambda i: (0, 0)),
        ),
        compiler_params=pltpu.CompilerParams(dimension_semantics=("arbitrary",)),
        cost_estimate=pl.CostEstimate(
            flops=int(flops_head),
            transcendentals=0,
            bytes_accessed=int(4 * B_pad * (8 + 2 * EMB + 128) + weight_bytes)),
    )(lat_pad, pooled, *weights)

    return out[:B, :1]                                                   # (B, 1)


def _init_linear(key, fan_in, fan_out):
    """Deterministic PyTorch-style uniform(-1/sqrt(fan_in), 1/sqrt(fan_in)) init."""
    kw, kb = jax.random.split(key)
    bound = 1.0 / np.sqrt(fan_in)
    W = jax.random.uniform(kw, (fan_in, fan_out), jnp.float32, -bound, bound)
    b = jax.random.uniform(kb, (1, fan_out), jnp.float32, -bound, bound)
    return W, b


def make_params(key):
    ks = jax.random.split(key, 7)
    p = {}
    # pred_lattice_en = build_mlp(6, 256, 2, 12)
    p["w1"], p["b1"] = _init_linear(ks[0], 6, 256)
    p["w2"], p["b2"] = _init_linear(ks[1], 256, 256)
    p["w3"], p["b3"] = _init_linear(ks[2], 256, 12)
    # fc_out: 140 -> 70 -> 35 -> 17 -> 1
    p["w4"], p["b4"] = _init_linear(ks[3], 140, 70)
    p["w5"], p["b5"] = _init_linear(ks[4], 70, 35)
    p["w6"], p["b6"] = _init_linear(ks[5], 35, 17)
    p["w7"], p["b7"] = _init_linear(ks[6], 17, 1)
    return p


def reference_forward(hidden_atom, batch_idx, lattice, params):
    """Pure-JAX reference of the same forward (for correctness check)."""
    B = lattice.shape[0]
    seg = jax.nn.one_hot(batch_idx, B, dtype=jnp.float32).T
    z = jnp.maximum(lattice @ params["w1"] + params["b1"], 0.0)
    z = jnp.maximum(z @ params["w2"] + params["b2"], 0.0)
    latent = z @ params["w3"] + params["b3"]
    counts = seg.sum(1, keepdims=True)
    mean = (seg @ hidden_atom) / counts
    mx = jnp.max(jnp.where(seg[:, :, None] > 0.5, hidden_atom[None], -1e30), axis=1)
    feat = jnp.concatenate([mean, mx, latent], axis=-1)

    def lrelu(x):
        return jnp.where(x > 0, x, 0.01 * x)

    y = lrelu(feat @ params["w4"] + params["b4"])
    y = lrelu(y @ params["w5"] + params["b5"])
    y = lrelu(y @ params["w6"] + params["b6"])
    return y @ params["w7"] + params["b7"]


if __name__ == "__main__":
    key = jax.random.PRNGKey(0)
    k_param, k_h, k_lat = jax.random.split(key, 3)

    B = 2            # graphs in the batch
    N = 16           # total atoms across the batch
    EMB = 64         # encoder per-atom embedding dim (emb_dim of finetune_ENDE)

    # TODO(synk): DimeNetPlusPlusWrap encoder is not defined in the source module;
    # its per-atom output `hidden_atom` is provided as a synthetic input here.
    hidden_atom = jax.random.normal(k_h, (N, EMB), jnp.float32)
    batch_idx = jnp.asarray([0] * 8 + [1] * 8, dtype=jnp.int32)     # batch.batch (sorted)
    scaled_lattice = jax.random.normal(k_lat, (B, 6), jnp.float32)  # scaled_lattice_tensor

    params = make_params(k_param)

    out = finetune_ende_forward(hidden_atom, batch_idx, scaled_lattice, params)
    out = jax.block_until_ready(out)

    ref = reference_forward(hidden_atom, batch_idx, scaled_lattice, params)
    np.testing.assert_allclose(np.asarray(out), np.asarray(ref), rtol=1e-4, atol=1e-5)

    print("KERNEL_OK")
</pallas_src>

<mosaic_0001>
module attributes {stable_mosaic.version = 11 : i64} {
  func.func @pool_kernel(%arg0: i32, %arg1: memref<8xi32, #tpu.memory_space<smem>>, %arg2: memref<1x8x64xf32, #tpu.memory_space<vmem>>, %arg3: memref<1x1x128xf32, #tpu.memory_space<vmem>>) attributes {dimension_semantics = [#tpu.dimension_semantics<parallel>], iteration_bounds = array<i64: 8>, scalar_prefetch = 1 : i64, scratch_operands = 0 : i64, tpu.core_type = #tpu.core_type<tc>, window_params = [{transform_indices = @transform_0, window_bounds = array<i64: 1, 8, 64>}, {transform_indices = @transform_1, window_bounds = array<i64: 1, 1, 128>}]} {
    %0 = arith.index_cast %arg0 : i32 to index
    %1 = memref.load %arg1[%0] : memref<8xi32, #tpu.memory_space<smem>>
    %c0 = arith.constant 0 : index
    %c0_0 = arith.constant 0 : index
    %c0_1 = arith.constant 0 : index
    %2 = vector.load %arg2[%c0, %c0_0, %c0_1] : memref<1x8x64xf32, #tpu.memory_space<vmem>>, vector<1x8x64xf32>
    %3 = vector.shape_cast %2 : vector<1x8x64xf32> to vector<8x64xf32>
    %4 = tpu.iota {dimensions = array<i32: 0>} : vector<8x1xi32>
    %5 = vector.broadcast %1 : i32 to vector<8x1xi32>
    %6 = arith.cmpi slt, %4, %5 : vector<8x1xi32>
    %cst = arith.constant dense<0.000000e+00> : vector<64xf32>
    %7 = vector.multi_reduction <add>, %3, %cst [0] : vector<8x64xf32> to vector<64xf32>
    %8 = vector.shape_cast %7 : vector<64xf32> to vector<1x64xf32>
    %9 = arith.sitofp %1 : i32 to f32
    %cst_2 = arith.constant 1.000000e+00 : f32
    %10 = arith.maximumf %9, %cst_2 : f32
    %cst_3 = arith.constant 1.000000e+00 : f32
    %11 = arith.divf %cst_3, %10 : f32
    %12 = vector.broadcast %11 : f32 to vector<1x64xf32>
    %13 = arith.mulf %8, %12 : vector<1x64xf32>
    %cst_4 = arith.constant -3.000000e+38 : f32
    %14 = vector.shape_cast %6 : vector<8x1xi1> to vector<8x1xi1>
    %15 = vector.broadcast %14 : vector<8x1xi1> to vector<8x64xi1>
    %16 = vector.broadcast %cst_4 : f32 to vector<8x64xf32>
    %17 = arith.select %15, %3, %16 : vector<8x64xi1>, vector<8x64xf32>
    %cst_5 = arith.constant dense<0xFF800000> : vector<64xf32>
    %18 = vector.multi_reduction <maximumf>, %17, %cst_5 [0] : vector<8x64xf32> to vector<64xf32>
    %19 = vector.shape_cast %18 : vector<64xf32> to vector<1x64xf32>
    %c0_i32 = arith.constant 0 : i32
    %20 = arith.cmpi sgt, %1, %c0_i32 : i32
    %cst_6 = arith.constant 0.000000e+00 : f32
    %21 = vector.broadcast %cst_6 : f32 to vector<1x64xf32>
    %22 = arith.select %20, %19, %21 : vector<1x64xf32>
    %23 = tpu.concatenate %13, %22 in 1 : vector<1x64xf32>, vector<1x64xf32> -> vector<1x128xf32>
    %c0_7 = arith.constant 0 : index
    %c0_8 = arith.constant 0 : index
    %c0_9 = arith.constant 0 : index
    %24 = vector.load %arg3[%c0_7, %c0_8, %c0_9] : memref<1x1x128xf32, #tpu.memory_space<vmem>>, vector<1x1x128xf32>
    %25 = vector.shape_cast %24 : vector<1x1x128xf32> to vector<1x128xf32>
    %26 = vector.shape_cast %23 : vector<1x128xf32> to vector<1x1x128xf32>
    tpu.vector_store %arg3[%c0_7, %c0_8, %c0_9], %26 {strides = array<i32>} : memref<1x1x128xf32, #tpu.memory_space<vmem>>, vector<1x1x128xf32>,
    return
  }
  func.func @transform_0(%arg0: i32, %arg1: memref<8xi32, #tpu.memory_space<smem>>) -> (i32, i32, i32) {
    %c0_i32 = arith.constant 0 : i32
    %c0_i32_0 = arith.constant 0 : i32
    %c0_i32_1 = arith.constant 0 : i32
    return %arg0, %c0_i32, %c0_i32_0 : i32, i32, i32
  }
  func.func @transform_1(%arg0: i32, %arg1: memref<8xi32, #tpu.memory_space<smem>>) -> (i32, i32, i32) {
    %c0_i32 = arith.constant 0 : i32
    %c0_i32_0 = arith.constant 0 : i32
    %c0_i32_1 = arith.constant 0 : i32
    return %arg0, %c0_i32, %c0_i32_0 : i32, i32, i32
  }
}

</mosaic_0001>

<llo_original>
// kernel: tpu_custom_call.1
$region0: #{tpu_custom_call.1}
  #allocation0 [shape = 'u32[]', space=smem, size = 0x4, offset = 0x4, fixed_abs, tag = 'smem constant byte address 0x4 - core index']
  #allocation1 [shape = 'u32[144,128]{1,0:T(1,128)}', space=vmem, size = 0x12000, scoped, tag = 'internal scratch']
  #allocation2 [shape = 's32[1]{0}', space=sflag, size = 0x4, scoped, tag = 'scoped memory for tpu_custom_call.1']
  #allocation3 [shape = 'u8[512]{0}', space=smem, size = 0x200, scoped, tag = 'prefetched SMEM operand 0']
  %s0 = inlined_call_operand.hbm [shape: s32[8], index: 0, kind: input, shape index: {}]
  %s1 = inlined_call_operand.hbm [shape: f32[8,8,64], index: 1, kind: input, shape index: {}]
  %s2 = inlined_call_operand.hbm [shape: f32[8,1,128], index: 2, kind: output, shape index: {}]
  %s3 = sld [smem:[#allocation0]]
  $region41: #{tpu_custom_call.1} parent=0
    _
  %s5 = ssub.s32 1, %s3
  %s6 = scalar_select 0, %s5, %s3
  %8 = dma.hbm_to_smem %s0, 16, [#allocation3], [#allocation2]
  %9 = dma.done [#allocation2], 16
  %10 = sfence
  $region1: #{tpu_custom_call.1} parent=0
    #allocation4 [shape = 'u8[8192]{0}', space=vmem, size = 0x2000, scoped, tag = 'input window, operand 1']
    #allocation5 [shape = 's32[2]{0}', space=sflag, size = 0x8, scoped, tag = 'scoped memory for tpu_custom_call.1']
    #allocation6 [shape = 's32[2]{0}', space=sflag, size = 0x8, scoped, tag = 'scoped memory for tpu_custom_call.1']
    #allocation7 [shape = 'u8[1024]{0}', space=vmem, size = 0x400, scoped, tag = 'output window, operand 0']
    %11 = vsyncpa [#allocation5], 0
    %s12 = scalar_lea.sflag [#allocation5], 1
    %13 = vsyncpa %s12, 0
    %14 = vsyncpa [#allocation6], 0
    %s15 = scalar_lea.sflag [#allocation6], 1
    %16 = vsyncpa %s15, 0
    loop: start=0, step=1, limit=10
    $region2: #{tpu_custom_call.1} parent=1 // loop_pre_header
      _
    $region3: #{tpu_custom_call.1} parent=1 // loop_header
      %s18 = sphi 0, %s22
      %p19 = scmp.ge.s32.totalorder %s18, 10
      %s28 = sphi 0, %s30
      %s31 = sphi 0, %s28
      %s32 = sphi 0, %s31
      %s48 = sphi 0, %s32
      %s54 = sphi 0, %s56
      %s57 = sphi 0, %s54
      %s58 = sphi 0, %s57
      %s74 = sphi 0, %s58
    $region4: #{tpu_custom_call.1} parent=1 // loop_header_branch
      %21 = sbr.rel (%p19) target = $region8
    $region5: #{tpu_custom_call.1} parent=1 // loop_body
      %s23 = ssub.s32 %s18, 1
      %s24 = ssub.s32 %s18, 2
      %s25 = sadd.s32 %s18, 1
      %s26 = ssub.s32 %s18, %s25
      %p27 = scmp.eq.s32.totalorder %s26, 0
      %s29 = sadd.s32 %s28, 1
      %s30 = scalar_select %p27, %s28, %s29
      %p33 = pneg %p27
      %p34 = scmp.eq.s32.totalorder %s18, 7
      %p35 = por %p33, %p34
      %p36 = scmp.ne.s32.totalorder %s28, %s31
      %p37 = scmp.eq.s32.totalorder %s18, 0
      %p38 = por %p36, %p37
      %p39 = scmp.ne.s32.totalorder %s28, %s31
      %p40 = scmp.eq.s32.totalorder %s23, 7
      %p41 = por %p39, %p40
      %p42 = scmp.ne.s32.totalorder %s31, %s32
      %p43 = scmp.eq.s32.totalorder %s23, 0
      %p44 = por %p42, %p43
      %p45 = scmp.ne.s32.totalorder %s31, %s32
      %p46 = scmp.eq.s32.totalorder %s24, 7
      %p47 = por %p45, %p46
      %p49 = scmp.ne.s32.totalorder %s32, %s48
      %p50 = scmp.eq.s32.totalorder %s24, 0
      %p51 = por %p49, %p50
      %s52 = ssub.s32 %s18, %s25
      %p53 = scmp.eq.s32.totalorder %s52, 0
      %s55 = sadd.s32 %s54, 1
      %s56 = scalar_select %p53, %s54, %s55
      %p59 = pneg %p53
      %p60 = scmp.eq.s32.totalorder %s18, 7
      %p61 = por %p59, %p60
      %p62 = scmp.ne.s32.totalorder %s54, %s57
      %p63 = scmp.eq.s32.totalorder %s18, 0
      %p64 = por %p62, %p63
      %p65 = scmp.ne.s32.totalorder %s54, %s57
      %p66 = scmp.eq.s32.totalorder %s23, 7
      %p67 = por %p65, %p66
      %p68 = scmp.ne.s32.totalorder %s57, %s58
      %p69 = scmp.eq.s32.totalorder %s23, 0
      %p70 = por %p68, %p69
      %p71 = scmp.ne.s32.totalorder %s57, %s58
      %p72 = scmp.eq.s32.totalorder %s24, 7
      %p73 = por %p71, %p72
      %p75 = scmp.ne.s32.totalorder %s58, %s74
      %p76 = scmp.eq.s32.totalorder %s24, 0
      %p77 = por %p75, %p76
      %p78 = scmp.le.s32.totalorder 1, %s18
      %p79 = scmp.lt.s32.totalorder %s18, 9
      %p80 = pnand %p78, %p79
      %p81 = pneg %p80
      // Predicated region
      $region9: #{tpu_custom_call.1} parent=5 // pred_check
        _
      $region10: #{tpu_custom_call.1} parent=5 // pred_check_branch
        %83 = sbr.rel (%p80) target = $region12
      $region11: #{tpu_custom_call.1} parent=5 // pred_region
        %s84 = ssub.s32 %s18, 1
      $region12: #{tpu_custom_call.1} parent=5 // pred_fallthru
        _
      %p85 = scmp.lt.s32.totalorder %s18, 8
      // Predicated region
      $region13: #{tpu_custom_call.1} parent=5 // pred_check
        %p86 = pneg %p85
      $region14: #{tpu_custom_call.1} parent=5 // pred_check_branch
        %88 = sbr.rel (%p86) target = $region16
      $region15: #{tpu_custom_call.1} parent=5 // pred_region
        // Predicated region
        $region17: #{tpu_custom_call.1} parent=15 // pred_check
          %p89 = pneg %p38
        $region18: #{tpu_custom_call.1} parent=15 // pred_check_branch
          %91 = sbr.rel (%p89) target = $region20
        $region19: #{tpu_custom_call.1} parent=15 // pred_region
          %s92 = sand.u32 %s28, 1
          %s93 = scalar_lea.sflag [#allocation5], %s92
          %s94 = sand.u32 %s28, 1
          %s95 = smul.addr %s94, 8
          %s96 = scalar_lea.vmem [#allocation4], %s95
          %s98 = ssub.s32 128, 128
          %99 = vsyncadd %s93, %s98
          %s100 = smul.addr %s18, 128
          %s101 = scalar_lea.hbm %s1, %s100
          %s103 = sshll.u32 %s96, 4
          %s104 = int_to_ptr.vmem [resolvable:$true] %s103
          %106 = dma.hbm_to_vmem [thread:$0]  %s101, 128, %s104, %s93
        $region20: #{tpu_custom_call.1} parent=15 // pred_fallthru
          _
      $region16: #{tpu_custom_call.1} parent=5 // pred_fallthru
        _
      %p107 = scmp.le.s32.totalorder 1, %s18
      %p108 = scmp.lt.s32.totalorder %s18, 9
      %p109 = pnand %p107, %p108
      %p110 = pneg %p109
      // Predicated region
      $region21: #{tpu_custom_call.1} parent=5 // pred_check
        _
      $region22: #{tpu_custom_call.1} parent=5 // pred_check_branch
        %112 = sbr.rel (%p109) target = $region24
      $region23: #{tpu_custom_call.1} parent=5 // pred_region
        %s113 = ssub.s32 %s18, 1
        %s114 = sand.u32 %s31, 1
        %s115 = scalar_lea.sflag [#allocation5], %s114
        %s116 = sand.u32 %s31, 1
        %s117 = smul.addr %s116, 8
        %s118 = scalar_lea.vmem [#allocation4], %s117
        // Predicated region
        $region25: #{tpu_custom_call.1} parent=23 // pred_check
          %p119 = pneg %p44
        $region26: #{tpu_custom_call.1} parent=23 // pred_check_branch
          %121 = sbr.rel (%p119) target = $region28
        $region27: #{tpu_custom_call.1} parent=23 // pred_region
          %122 = dma.done %s115, 128
        $region28: #{tpu_custom_call.1} parent=23 // pred_fallthru
          _
        %s123 = sand.u32 %s31, 1
        %s124 = scalar_lea.sflag [#allocation5], %s123
        %s125 = sand.u32 %s31, 1
        %s126 = smul.addr %s125, 8
        %s127 = scalar_lea.vmem [#allocation4], %s126
        %p128 = pneg %p44
        %p129 = pneg %p41
        %p130 = pneg %p70
        %p131 = pneg %p67
        %s132 = sand.u32 %s57, 1
        %s133 = scalar_lea.sflag [#allocation6], %s132
        %s134 = sand.u32 %s57, 1
        %s135 = scalar_lea.vmem [#allocation7], %s134
        %s136 = sld [smem:[#allocation3 + %s23]]
        %v137 = vld [vmem:[%s118] sm:$0xff]
        %v138 = vlaneseq
        %v139 = vshrl.u32 %v138, 7
        %v140 = vstv %s136
        %vm141 = vcmp.lt.s32.totalorder %v139, %v140
        %vm142 = vcmask 523264
        %v143 = vsel %vm142, %v137, 0.0
        %v144 = vrot.slane %v143, 4
        %v145 = vadd.f32 %v143, %v144
        %v146 = vrot.slane %v145, 2
        %v147 = vadd.f32 %v145, %v146
        %v148 = vrot.slane %v147, 1
        %v149 = vadd.f32 %v147, %v148
        %s150 = scvt.s32.f32 %s136
        %s151 = smax.f32 %s150, 1.0
        %v152 = vstv %s151
        %v153 = vrcp.pop %v152
        %s154 = vtos %v153
        %v155 = vstv %s154
        %v156 = vmul.f32 %v149, %v155
        %v157 = vsel %vm141, 1, 0
        %vm158 = vcmp.eq.s32.totalorder %v157, 1
        %v159 = vsel %vm158, %v137, -3e+38
        %v160 = vsel %vm142, %v159, -inf
        %v161 = vrot.slane %v160, 4
        %v162 = vmax.f32 %v160, %v161
        %v163 = vrot.slane %v162, 2
        %v164 = vmax.f32 %v162, %v163
        %v165 = vrot.slane %v164, 1
        %v166 = vmax.f32 %v164, %v165
        %p167 = scmp.gt.s32.totalorder %s136, 0
        %s168 = scalar_select %p167, 1, 0
        %v169 = vstv %s168
        %vm170 = vcmp.eq.s32.totalorder %v169, 1
        %v171 = vsel %vm170, %v166, 0.0
        %173 = vrot.lane.b32.xlu0 %v171, 64
        %v174 = vpop.permute.xlu0 %173
        %v176 = vsel %vm142, %v156, %v174
        %177 = vst [vmem:[%s135] sm:$0x1] %v176
        %s178 = sand.u32 %s57, 1
        %s179 = scalar_lea.sflag [#allocation6], %s178
        %s180 = sand.u32 %s57, 1
        %s181 = scalar_lea.vmem [#allocation7], %s180
        // Predicated region
        $region29: #{tpu_custom_call.1} parent=23 // pred_check
          %p182 = pneg %p67
        $region30: #{tpu_custom_call.1} parent=23 // pred_check_branch
          %184 = sbr.rel (%p182) target = $region32
        $region31: #{tpu_custom_call.1} parent=23 // pred_region
          %s186 = ssub.s32 16, 16
          %187 = vsyncadd %s179, %s186
          %s188 = smul.addr %s23, 16
          %s189 = scalar_lea.hbm %s2, %s188
          %s191 = sshll.u32 %s181, 4
          %s192 = int_to_ptr.vmem [resolvable:$true] %s191
          %194 = dma.vmem_to_hbm [thread:$0]  %s192, 16, %s189, %s179
        $region32: #{tpu_custom_call.1} parent=23 // pred_fallthru
          _
      $region24: #{tpu_custom_call.1} parent=5 // pred_fallthru
        _
      %p195 = scmp.le.s32.totalorder 2, %s18
      // Predicated region
      $region33: #{tpu_custom_call.1} parent=5 // pred_check
        %p196 = pneg %p195
      $region34: #{tpu_custom_call.1} parent=5 // pred_check_branch
        %198 = sbr.rel (%p196) target = $region36
      $region35: #{tpu_custom_call.1} parent=5 // pred_region
        %s199 = ssub.s32 %s18, 2
        // Predicated region
        $region37: #{tpu_custom_call.1} parent=35 // pred_check
          %p200 = pneg %p73
        $region38: #{tpu_custom_call.1} parent=35 // pred_check_branch
          %202 = sbr.rel (%p200) target = $region40
        $region39: #{tpu_custom_call.1} parent=35 // pred_region
          %s203 = sand.u32 %s58, 1
          %s204 = scalar_lea.sflag [#allocation6], %s203
          %s205 = sand.u32 %s58, 1
          %s206 = scalar_lea.vmem [#allocation7], %s205
          %207 = dma.done %s204, 16
        $region40: #{tpu_custom_call.1} parent=35 // pred_fallthru
          _
      $region36: #{tpu_custom_call.1} parent=5 // pred_fallthru
        _
    $region6: #{tpu_custom_call.1} parent=1 // loop_footer
      %s22 = sadd.s32 1, %s18
    $region7: #{tpu_custom_call.1} parent=1 // loop_footer_branch
      %17 = sbr.rel target = $region3
    $region8: #{tpu_custom_call.1} parent=1 // loop_exit
      _
    %208 = vsyncpa [#allocation5], 1
    %s209 = scalar_lea.sflag [#allocation5], 1
    %210 = vsyncpa %s209, 1
    %211 = vsyncpa [#allocation6], 1
    %s212 = scalar_lea.sflag [#allocation6], 1
    %213 = vsyncpa %s212, 1

</llo_original>
